<compile_context>
chip_gen: v7x
topology: tpu7x:2x2x1
jax: 0.10.0
libtpu: 0.0.40
codegen_flags: <defaults>
</compile_context>

<pallas_src>
import functools

import jax
import jax.numpy as jnp
from jax.experimental import pallas as pl
from jax.experimental.pallas import tpu as pltpu

_LANE = 128    # lane width: last dim of every tile padded to a multiple of this
_BGRAIN = 16   # batch-tile granularity: covers f32 (8) and bf16 (16) sublane packing


def _round_up(n, m):
    return ((n + m - 1) // m) * m


def _pad2d(a, rows, cols):
    r, c = a.shape
    return jnp.pad(a, ((0, rows - r), (0, cols - c)))


def _default_act_dtype():
    """bf16 activation math on v6e/v7x (bf16 VPU/EUP); f32 on v5e and older."""
    try:
        kind = jax.devices()[0].device_kind.lower()
    except Exception:
        return jnp.float32
    if any(tag in kind for tag in ("v2", "v3", "v4", "v5")):
        return jnp.float32
    return jnp.bfloat16


def _mlp_kernel(x_ref,
                w1_ref, b1_ref,
                w2_ref, b2_ref,
                w3_ref, b3_ref,
                w4_ref, b4_ref,
                o_ref, *, act_dtype):
    """Whole 4-layer MLP for one batch tile.

    Matmuls: bf16 operands on the MXU, f32 accumulation, f32 bias add.
    Sigmoid: single-EUP-op tanh identity, in `act_dtype` (bf16 on v6e/v7x)."""
    cdt = w1_ref.dtype                       # matmul operand dtype (bf16 by default)
    half = jnp.asarray(0.5, dtype=act_dtype)

    def dense_sigmoid(h, w_ref, b_ref):
        z = jnp.dot(h.astype(cdt), w_ref[...],
                    preferred_element_type=jnp.float32) + b_ref[...]
        # sigmoid(z) = 0.5 * tanh(0.5 * z) + 0.5  — one EUP push per element.
        za = (0.5 * z).astype(act_dtype)
        return jnp.tanh(za) * half + half    # result dtype == act_dtype

    h = dense_sigmoid(x_ref[...], w1_ref, b1_ref)
    h = dense_sigmoid(h, w2_ref, b2_ref)     # padded hidden lanes hold sigmoid(0)=0.5,
    h = dense_sigmoid(h, w3_ref, b3_ref)     # but the matching weight rows are zero,
    h = dense_sigmoid(h, w4_ref, b4_ref)     # so they never leak into real outputs.
    o_ref[...] = h.astype(o_ref.dtype)


@functools.partial(jax.jit,
                   static_argnames=("block_b", "matmul_dtype", "act_dtype",
                                    "store_dtype", "out_dtype"))
def _sp_en_model_forward(x, params, *, block_b, matmul_dtype, act_dtype,
                         store_dtype, out_dtype):
    B, dim_in = x.shape
    w1, b1 = params["w1"], params["b1"]
    w2, b2 = params["w2"], params["b2"]
    w3, b3 = params["w3"], params["b3"]
    w4, b4 = params["w4"], params["b4"]
    dim_emb = w1.shape[1]
    dim_out = w4.shape[1]

    # ---- pad feature dims to full 128-lane multiples (lane-dense tiles) ----
    din_p = _round_up(dim_in, _LANE)
    demb_p = _round_up(dim_emb, _LANE)
    dout_p = _round_up(dim_out, _LANE)

    # ---- batch tiling: large tiles, but >= 2 grid steps when the batch allows
    # it so the "parallel" axis can be sharded across v7x's two TensorCores ----
    B16 = _round_up(B, _BGRAIN)
    bb = min(block_b, _round_up((B16 + 1) // 2, _BGRAIN))
    bb = max(bb, _BGRAIN)
    Bp = _round_up(B16, bb)
    grid = (Bp // bb,)

    # ---- x: skip the extra HBM pass when no padding is needed (cast to bf16
    # happens in-kernel); otherwise pad+cast and let XLA fuse it into the
    # pallas_call operand (allow_input_fusion on operand 0). ----
    if (Bp != B) or (din_p != dim_in):
        xp = jnp.pad(x, ((0, Bp - B), (0, din_p - dim_in))).astype(matmul_dtype)
    else:
        xp = x

    # ---- zero-pad params; weights in matmul dtype, biases stay f32 ----
    w1p = _pad2d(w1, din_p, demb_p).astype(matmul_dtype)
    w2p = _pad2d(w2, demb_p, demb_p).astype(matmul_dtype)
    w3p = _pad2d(w3, demb_p, demb_p).astype(matmul_dtype)
    w4p = _pad2d(w4, demb_p, dout_p).astype(matmul_dtype)
    b1p = _pad2d(b1, 1, demb_p).astype(jnp.float32)
    b2p = _pad2d(b2, 1, demb_p).astype(jnp.float32)
    b3p = _pad2d(b3, 1, demb_p).astype(jnp.float32)
    b4p = _pad2d(b4, 1, dout_p).astype(jnp.float32)

    def full_spec(arr):
        # Whole array every step; constant block index => DMA'd once, reused.
        return pl.BlockSpec(arr.shape, lambda i: (0, 0))

    kernel = functools.partial(_mlp_kernel, act_dtype=act_dtype)

    out = pl.pallas_call(
        kernel,
        out_shape=jax.ShapeDtypeStruct((Bp, dout_p), store_dtype),
        grid_spec=pltpu.PrefetchScalarGridSpec(
            num_scalar_prefetch=0,
            grid=grid,
            in_specs=[
                pl.BlockSpec((bb, din_p), lambda i: (i, 0)),   # x batch tile
                full_spec(w1p), full_spec(b1p),
                full_spec(w2p), full_spec(b2p),
                full_spec(w3p), full_spec(b3p),
                full_spec(w4p), full_spec(b4p),
            ],
            out_specs=pl.BlockSpec((bb, dout_p), lambda i: (i, 0)),
        ),
        compiler_params=pltpu.CompilerParams(
            dimension_semantics=("parallel",),
            # Let XLA fuse the pad/convert producing operand 0 (x) into the call.
            allow_input_fusion=[True] + [False] * 8,
        ),
    )(xp, w1p, b1p, w2p, b2p, w3p, b3p, w4p, b4p)

    # Drop batch / output-feature padding; restore the module's f32 output dtype.
    out = out[:B, :dim_out]
    if out.dtype != out_dtype:
        out = out.astype(out_dtype)
    return out


def sp_en_model_forward(x, params, *, block_b=1024, matmul_dtype=jnp.bfloat16,
                        act_dtype=None, store_dtype=jnp.bfloat16,
                        out_dtype=jnp.float32):
    """x: (B, dim_in) float32. params: transposed weights/biases (W: (in,out),
    b: (1,out)) matching PyTorch's x @ W.T + b."""
    if act_dtype is None:
        act_dtype = _default_act_dtype()
    return _sp_en_model_forward(x, params, block_b=block_b,
                                matmul_dtype=matmul_dtype, act_dtype=act_dtype,
                                store_dtype=store_dtype, out_dtype=out_dtype)


def init_params(key, dim_in, dim_emb, dim_out, dtype=jnp.float32):
    """Deterministic synthetic parameters (PyTorch Linear-style uniform init),
    stored transposed: W has shape (in, out), b has shape (1, out)."""
    dims = [(dim_in, dim_emb), (dim_emb, dim_emb), (dim_emb, dim_emb), (dim_emb, dim_out)]
    params = {}
    keys = jax.random.split(key, 2 * len(dims))
    for idx, (fan_in, fan_out) in enumerate(dims):
        bound = 1.0 / (fan_in ** 0.5)
        w = jax.random.uniform(keys[2 * idx], (fan_in, fan_out),
                               minval=-bound, maxval=bound, dtype=dtype)
        b = jax.random.uniform(keys[2 * idx + 1], (1, fan_out),
                               minval=-bound, maxval=bound, dtype=dtype)
        params[f"w{idx + 1}"] = w
        params[f"b{idx + 1}"] = b
    return params


def reference_forward(x, params):
    h = jax.nn.sigmoid(x @ params["w1"] + params["b1"])
    h = jax.nn.sigmoid(h @ params["w2"] + params["b2"])
    h = jax.nn.sigmoid(h @ params["w3"] + params["b3"])
    return jax.nn.sigmoid(h @ params["w4"] + params["b4"])


if __name__ == "__main__":
    # Small shapes consistent with the module (para.dim_in / dim_embeding / dim_out);
    # batch=32 exercises the multi-step (2-TensorCore-shardable) grid path.
    batch = 32
    dim_in = 32
    dim_emb = 64
    dim_out = 16

    key = jax.random.PRNGKey(0)
    k_x, k_p = jax.random.split(key)
    x = jax.random.normal(k_x, (batch, dim_in), dtype=jnp.float32)
    params = init_params(k_p, dim_in, dim_emb, dim_out)

    out = sp_en_model_forward(x, params)
    out = jax.block_until_ready(out)

    ref = reference_forward(x, params)
    assert out.shape == (batch, dim_out)
    assert out.dtype == jnp.float32
    # bf16 matmul operands (+ bf16 tanh on v6e/v7x, bf16 output store) vs. the
    # f32 reference: loose but still bug-detecting tolerance on sigmoid outputs.
    max_err = float(jnp.max(jnp.abs(out - ref)))
    assert max_err < 4e-2, f"mismatch vs. JAX reference (max abs err {max_err})"

    print("KERNEL_OK")
</pallas_src>

<mosaic_0001>
module attributes {stable_mosaic.version = 11 : i64} {
  func.func @_mlp_kernel(%arg0: i32, %arg1: memref<16x128xbf16, #tpu.memory_space<vmem>>, %arg2: memref<128x128xbf16, #tpu.memory_space<vmem>>, %arg3: memref<1x128xf32, #tpu.memory_space<vmem>>, %arg4: memref<128x128xbf16, #tpu.memory_space<vmem>>, %arg5: memref<1x128xf32, #tpu.memory_space<vmem>>, %arg6: memref<128x128xbf16, #tpu.memory_space<vmem>>, %arg7: memref<1x128xf32, #tpu.memory_space<vmem>>, %arg8: memref<128x128xbf16, #tpu.memory_space<vmem>>, %arg9: memref<1x128xf32, #tpu.memory_space<vmem>>, %arg10: memref<16x128xbf16, #tpu.memory_space<vmem>>) attributes {dimension_semantics = [#tpu.dimension_semantics<parallel>], iteration_bounds = array<i64: 2>, scalar_prefetch = 0 : i64, scratch_operands = 0 : i64, tpu.core_type = #tpu.core_type<tc>, window_params = [{transform_indices = @transform_0, window_bounds = array<i64: 16, 128>}, {pipeline_mode = #tpu.pipeline_mode<synchronous>, transform_indices = @transform_1, window_bounds = array<i64: 128, 128>}, {pipeline_mode = #tpu.pipeline_mode<synchronous>, transform_indices = @transform_2, window_bounds = array<i64: 1, 128>}, {pipeline_mode = #tpu.pipeline_mode<synchronous>, transform_indices = @transform_3, window_bounds = array<i64: 128, 128>}, {pipeline_mode = #tpu.pipeline_mode<synchronous>, transform_indices = @transform_4, window_bounds = array<i64: 1, 128>}, {pipeline_mode = #tpu.pipeline_mode<synchronous>, transform_indices = @transform_5, window_bounds = array<i64: 128, 128>}, {pipeline_mode = #tpu.pipeline_mode<synchronous>, transform_indices = @transform_6, window_bounds = array<i64: 1, 128>}, {pipeline_mode = #tpu.pipeline_mode<synchronous>, transform_indices = @transform_7, window_bounds = array<i64: 128, 128>}, {pipeline_mode = #tpu.pipeline_mode<synchronous>, transform_indices = @transform_8, window_bounds = array<i64: 1, 128>}, {transform_indices = @transform_9, window_bounds = array<i64: 16, 128>}]} {
    %c0 = arith.constant 0 : index
    %c0_0 = arith.constant 0 : index
    %0 = vector.load %arg1[%c0, %c0_0] : memref<16x128xbf16, #tpu.memory_space<vmem>>, vector<16x128xbf16>
    %c0_1 = arith.constant 0 : index
    %c0_2 = arith.constant 0 : index
    %1 = vector.load %arg2[%c0_1, %c0_2] : memref<128x128xbf16, #tpu.memory_space<vmem>>, vector<128x128xbf16>
    %cst = arith.constant dense<0.000000e+00> : vector<16x128xf32>
    %2 = tpu.matmul %0, %1, %cst {dimension_numbers = #tpu.dot_dimension_numbers<[1], [0], [0], [1], [0, 0, 1, 1], [], []>} : vector<16x128xbf16>, vector<128x128xbf16>, vector<16x128xf32> -> vector<16x128xf32>
    %c0_3 = arith.constant 0 : index
    %c0_4 = arith.constant 0 : index
    %3 = vector.load %arg3[%c0_3, %c0_4] : memref<1x128xf32, #tpu.memory_space<vmem>>, vector<1x128xf32>
    %4 = vector.broadcast %3 : vector<1x128xf32> to vector<16x128xf32>
    %5 = arith.addf %2, %4 : vector<16x128xf32>
    %cst_5 = arith.constant 5.000000e-01 : f32
    %6 = vector.broadcast %cst_5 : f32 to vector<16x128xf32>
    %7 = arith.mulf %6, %5 : vector<16x128xf32>
    %8 = arith.truncf %7 : vector<16x128xf32> to vector<16x128xbf16>
    %9 = math.tanh %8 : vector<16x128xbf16>
    %cst_6 = arith.constant 5.000000e-01 : bf16
    %10 = vector.broadcast %cst_6 : bf16 to vector<16x128xbf16>
    %11 = arith.mulf %9, %10 : vector<16x128xbf16>
    %cst_7 = arith.constant 5.000000e-01 : bf16
    %12 = vector.broadcast %cst_7 : bf16 to vector<16x128xbf16>
    %13 = arith.addf %11, %12 : vector<16x128xbf16>
    %c0_8 = arith.constant 0 : index
    %c0_9 = arith.constant 0 : index
    %14 = vector.load %arg4[%c0_8, %c0_9] : memref<128x128xbf16, #tpu.memory_space<vmem>>, vector<128x128xbf16>
    %cst_10 = arith.constant dense<0.000000e+00> : vector<16x128xf32>
    %15 = tpu.matmul %13, %14, %cst_10 {dimension_numbers = #tpu.dot_dimension_numbers<[1], [0], [0], [1], [0, 0, 1, 1], [], []>} : vector<16x128xbf16>, vector<128x128xbf16>, vector<16x128xf32> -> vector<16x128xf32>
    %c0_11 = arith.constant 0 : index
    %c0_12 = arith.constant 0 : index
    %16 = vector.load %arg5[%c0_11, %c0_12] : memref<1x128xf32, #tpu.memory_space<vmem>>, vector<1x128xf32>
    %17 = vector.broadcast %16 : vector<1x128xf32> to vector<16x128xf32>
    %18 = arith.addf %15, %17 : vector<16x128xf32>
    %cst_13 = arith.constant 5.000000e-01 : f32
    %19 = vector.broadcast %cst_13 : f32 to vector<16x128xf32>
    %20 = arith.mulf %19, %18 : vector<16x128xf32>
    %21 = arith.truncf %20 : vector<16x128xf32> to vector<16x128xbf16>
    %22 = math.tanh %21 : vector<16x128xbf16>
    %cst_14 = arith.constant 5.000000e-01 : bf16
    %23 = vector.broadcast %cst_14 : bf16 to vector<16x128xbf16>
    %24 = arith.mulf %22, %23 : vector<16x128xbf16>
    %cst_15 = arith.constant 5.000000e-01 : bf16
    %25 = vector.broadcast %cst_15 : bf16 to vector<16x128xbf16>
    %26 = arith.addf %24, %25 : vector<16x128xbf16>
    %c0_16 = arith.constant 0 : index
    %c0_17 = arith.constant 0 : index
    %27 = vector.load %arg6[%c0_16, %c0_17] : memref<128x128xbf16, #tpu.memory_space<vmem>>, vector<128x128xbf16>
    %cst_18 = arith.constant dense<0.000000e+00> : vector<16x128xf32>
    %28 = tpu.matmul %26, %27, %cst_18 {dimension_numbers = #tpu.dot_dimension_numbers<[1], [0], [0], [1], [0, 0, 1, 1], [], []>} : vector<16x128xbf16>, vector<128x128xbf16>, vector<16x128xf32> -> vector<16x128xf32>
    %c0_19 = arith.constant 0 : index
    %c0_20 = arith.constant 0 : index
    %29 = vector.load %arg7[%c0_19, %c0_20] : memref<1x128xf32, #tpu.memory_space<vmem>>, vector<1x128xf32>
    %30 = vector.broadcast %29 : vector<1x128xf32> to vector<16x128xf32>
    %31 = arith.addf %28, %30 : vector<16x128xf32>
    %cst_21 = arith.constant 5.000000e-01 : f32
    %32 = vector.broadcast %cst_21 : f32 to vector<16x128xf32>
    %33 = arith.mulf %32, %31 : vector<16x128xf32>
    %34 = arith.truncf %33 : vector<16x128xf32> to vector<16x128xbf16>
    %35 = math.tanh %34 : vector<16x128xbf16>
    %cst_22 = arith.constant 5.000000e-01 : bf16
    %36 = vector.broadcast %cst_22 : bf16 to vector<16x128xbf16>
    %37 = arith.mulf %35, %36 : vector<16x128xbf16>
    %cst_23 = arith.constant 5.000000e-01 : bf16
    %38 = vector.broadcast %cst_23 : bf16 to vector<16x128xbf16>
    %39 = arith.addf %37, %38 : vector<16x128xbf16>
    %c0_24 = arith.constant 0 : index
    %c0_25 = arith.constant 0 : index
    %40 = vector.load %arg8[%c0_24, %c0_25] : memref<128x128xbf16, #tpu.memory_space<vmem>>, vector<128x128xbf16>
    %cst_26 = arith.constant dense<0.000000e+00> : vector<16x128xf32>
    %41 = tpu.matmul %39, %40, %cst_26 {dimension_numbers = #tpu.dot_dimension_numbers<[1], [0], [0], [1], [0, 0, 1, 1], [], []>} : vector<16x128xbf16>, vector<128x128xbf16>, vector<16x128xf32> -> vector<16x128xf32>
    %c0_27 = arith.constant 0 : index
    %c0_28 = arith.constant 0 : index
    %42 = vector.load %arg9[%c0_27, %c0_28] : memref<1x128xf32, #tpu.memory_space<vmem>>, vector<1x128xf32>
    %43 = vector.broadcast %42 : vector<1x128xf32> to vector<16x128xf32>
    %44 = arith.addf %41, %43 : vector<16x128xf32>
    %cst_29 = arith.constant 5.000000e-01 : f32
    %45 = vector.broadcast %cst_29 : f32 to vector<16x128xf32>
    %46 = arith.mulf %45, %44 : vector<16x128xf32>
    %47 = arith.truncf %46 : vector<16x128xf32> to vector<16x128xbf16>
    %48 = math.tanh %47 : vector<16x128xbf16>
    %cst_30 = arith.constant 5.000000e-01 : bf16
    %49 = vector.broadcast %cst_30 : bf16 to vector<16x128xbf16>
    %50 = arith.mulf %48, %49 : vector<16x128xbf16>
    %cst_31 = arith.constant 5.000000e-01 : bf16
    %51 = vector.broadcast %cst_31 : bf16 to vector<16x128xbf16>
    %52 = arith.addf %50, %51 : vector<16x128xbf16>
    %c0_32 = arith.constant 0 : index
    %c0_33 = arith.constant 0 : index
    %53 = vector.load %arg10[%c0_32, %c0_33] : memref<16x128xbf16, #tpu.memory_space<vmem>>, vector<16x128xbf16>
    tpu.vector_store %arg10[%c0_32, %c0_33], %52 {strides = array<i32>} : memref<16x128xbf16, #tpu.memory_space<vmem>>, vector<16x128xbf16>,
    return
  }
  func.func @transform_0(%arg0: i32) -> (i32, i32) {
    %c0_i32 = arith.constant 0 : i32
    %c0_i32_0 = arith.constant 0 : i32
    return %arg0, %c0_i32 : i32, i32
  }
  func.func @transform_1(%arg0: i32) -> (i32, i32) {
    %c0_i32 = arith.constant 0 : i32
    %c0_i32_0 = arith.constant 0 : i32
    %c0_i32_1 = arith.constant 0 : i32
    return %c0_i32, %c0_i32_0 : i32, i32
  }
  func.func @transform_2(%arg0: i32) -> (i32, i32) {
    %c0_i32 = arith.constant 0 : i32
    %c0_i32_0 = arith.constant 0 : i32
    %c0_i32_1 = arith.constant 0 : i32
    return %c0_i32, %c0_i32_0 : i32, i32
  }
  func.func @transform_3(%arg0: i32) -> (i32, i32) {
    %c0_i32 = arith.constant 0 : i32
    %c0_i32_0 = arith.constant 0 : i32
    %c0_i32_1 = arith.constant 0 : i32
    return %c0_i32, %c0_i32_0 : i32, i32
  }
  func.func @transform_4(%arg0: i32) -> (i32, i32) {
    %c0_i32 = arith.constant 0 : i32
    %c0_i32_0 = arith.constant 0 : i32
    %c0_i32_1 = arith.constant 0 : i32
    return %c0_i32, %c0_i32_0 : i32, i32
  }
  func.func @transform_5(%arg0: i32) -> (i32, i32) {
    %c0_i32 = arith.constant 0 : i32
    %c0_i32_0 = arith.constant 0 : i32
    %c0_i32_1 = arith.constant 0 : i32
    return %c0_i32, %c0_i32_0 : i32, i32
  }
  func.func @transform_6(%arg0: i32) -> (i32, i32) {
    %c0_i32 = arith.constant 0 : i32
    %c0_i32_0 = arith.constant 0 : i32
    %c0_i32_1 = arith.constant 0 : i32
    return %c0_i32, %c0_i32_0 : i32, i32
  }
  func.func @transform_7(%arg0: i32) -> (i32, i32) {
    %c0_i32 = arith.constant 0 : i32
    %c0_i32_0 = arith.constant 0 : i32
    %c0_i32_1 = arith.constant 0 : i32
    return %c0_i32, %c0_i32_0 : i32, i32
  }
  func.func @transform_8(%arg0: i32) -> (i32, i32) {
    %c0_i32 = arith.constant 0 : i32
    %c0_i32_0 = arith.constant 0 : i32
    %c0_i32_1 = arith.constant 0 : i32
    return %c0_i32, %c0_i32_0 : i32, i32
  }
  func.func @transform_9(%arg0: i32) -> (i32, i32) {
    %c0_i32 = arith.constant 0 : i32
    %c0_i32_0 = arith.constant 0 : i32
    return %arg0, %c0_i32 : i32, i32
  }
}

</mosaic_0001>

<llo_original>
// kernel: _sp_en_model_forward.2
$region0: #{_sp_en_model_forward.2}
  #allocation0 [shape = 'u32[]', space=smem, size = 0x4, offset = 0x4, fixed_abs, tag = 'smem constant byte address 0x4 - core index']
  #allocation1 [shape = 'u32[144,128]{1,0:T(1,128)}', space=vmem, size = 0x12000, scoped, tag = 'internal scratch']
  #allocation2 [shape = 'u32[2048]{0}', space=vmem, size = 0x2000, scoped, tag = 'scoped memory for _sp_en_model_forward.2']
  #allocation3 [shape = 'u32[2048]{0}', space=vmem, size = 0x2000, scoped, tag = 'scoped memory for _sp_en_model_forward.2']
  #allocation4 [shape = 'u32[2048]{0}', space=vmem, size = 0x2000, scoped, tag = 'scoped memory for _sp_en_model_forward.2']
  #allocation5 [shape = 'u32[2048]{0}', space=vmem, size = 0x2000, scoped, tag = 'scoped memory for _sp_en_model_forward.2']
  #allocation6 [shape = 'u32[2048]{0}', space=vmem, size = 0x2000, scoped, tag = 'scoped memory for _sp_en_model_forward.2']
  %s0 = inlined_call_operand.vmem [shape: bf16[128,128], index: 0, kind: input, shape index: {}]
  %s1 = inlined_call_operand.vmem [shape: f32[1,128], index: 1, kind: input, shape index: {}]
  %s2 = inlined_call_operand.vmem [shape: bf16[128,128], index: 2, kind: input, shape index: {}]
  %s3 = inlined_call_operand.vmem [shape: f32[1,128], index: 3, kind: input, shape index: {}]
  %s4 = inlined_call_operand.vmem [shape: bf16[128,128], index: 4, kind: input, shape index: {}]
  %s5 = inlined_call_operand.vmem [shape: f32[1,128], index: 5, kind: input, shape index: {}]
  %s6 = inlined_call_operand.vmem [shape: bf16[128,128], index: 6, kind: input, shape index: {}]
  %s7 = inlined_call_operand.vmem [shape: f32[1,128], index: 7, kind: input, shape index: {}]
  %s8 = inlined_call_operand.vmem [shape: bf16[32,32], index: 8, kind: input, shape index: {}]
  %s9 = inlined_call_operand.<no memory space> [shape: bf16[], index: 9, kind: input, shape index: {}]
  %s10 = inlined_call_operand.vmem [shape: bf16[32,128], index: 10, kind: output, shape index: {}]
  %s11 = sld [smem:[#allocation0]]
  $region69: #{_sp_en_model_forward.2} parent=0
    _
  %s13 = ssub.s32 1, %s11
  %s14 = scalar_select 0, %s13, %s11
  %v15 = vstv %s9
  %v16 = vunpack.i.l.bf16 %v15
  %v18 = vunpack.i.h.bf16 %v15
  loop: start=0, step=1, limit=4
  $region2: #{_sp_en_model_forward.2} parent=0 // loop_pre_header
    _
  $region3: #{_sp_en_model_forward.2} parent=0 // loop_header
    %s21 = sphi 0, %s25
    %p22 = scmp.ge.s32.totalorder %s21, 4
    %s31 = sphi 0, %s33
    %s34 = sphi 0, %s31
    %s35 = sphi 0, %s34
    %s51 = sphi 0, %s35
    %s55 = sphi 0, %s55
    %s57 = sphi 0, %s55
    %s58 = sphi 0, %s57
    %s72 = sphi 0, %s58
    %s76 = sphi 0, %s76
    %s78 = sphi 0, %s76
    %s79 = sphi 0, %s78
    %s93 = sphi 0, %s79
    %s97 = sphi 0, %s97
    %s99 = sphi 0, %s97
    %s100 = sphi 0, %s99
    %s114 = sphi 0, %s100
    %s118 = sphi 0, %s118
    %s120 = sphi 0, %s118
    %s121 = sphi 0, %s120
    %s135 = sphi 0, %s121
    %s139 = sphi 0, %s139
    %s141 = sphi 0, %s139
    %s142 = sphi 0, %s141
    %s156 = sphi 0, %s142
    %s160 = sphi 0, %s160
    %s162 = sphi 0, %s160
    %s163 = sphi 0, %s162
    %s177 = sphi 0, %s163
    %s181 = sphi 0, %s181
    %s183 = sphi 0, %s181
    %s184 = sphi 0, %s183
    %s198 = sphi 0, %s184
    %s202 = sphi 0, %s202
    %s204 = sphi 0, %s202
    %s205 = sphi 0, %s204
    %s219 = sphi 0, %s205
    %s225 = sphi 0, %s227
    %s228 = sphi 0, %s225
    %s229 = sphi 0, %s228
    %s245 = sphi 0, %s229
  $region4: #{_sp_en_model_forward.2} parent=0 // loop_header_branch
    %24 = sbr.rel (%p22) target = $region8
  $region5: #{_sp_en_model_forward.2} parent=0 // loop_body
    %s26 = ssub.s32 %s21, 1
    %s27 = ssub.s32 %s21, 2
    %s28 = sadd.s32 %s21, 1
    %s29 = ssub.s32 %s21, %s28
    %p30 = scmp.eq.s32.totalorder %s29, 0
    %s32 = sadd.s32 %s31, 1
    %s33 = scalar_select %p30, %s31, %s32
    %p36 = pneg %p30
    %p37 = scmp.eq.s32.totalorder %s21, 1
    %p38 = por %p36, %p37
    %p39 = scmp.ne.s32.totalorder %s31, %s34
    %p40 = scmp.eq.s32.totalorder %s21, 0
    %p41 = por %p39, %p40
    %p42 = scmp.ne.s32.totalorder %s31, %s34
    %p43 = scmp.eq.s32.totalorder %s26, 1
    %p44 = por %p42, %p43
    %p45 = scmp.ne.s32.totalorder %s34, %s35
    %p46 = scmp.eq.s32.totalorder %s26, 0
    %p47 = por %p45, %p46
    %p48 = scmp.ne.s32.totalorder %s34, %s35
    %p49 = scmp.eq.s32.totalorder %s27, 1
    %p50 = por %p48, %p49
    %p52 = scmp.ne.s32.totalorder %s35, %s51
    %p53 = scmp.eq.s32.totalorder %s27, 0
    %p54 = por %p52, %p53
    %s56 = sadd.s32 %s55, 1
    %p59 = scmp.eq.s32.totalorder %s21, 1
    %p60 = scmp.ne.s32.totalorder %s55, %s57
    %p61 = scmp.eq.s32.totalorder %s21, 0
    %p62 = por %p60, %p61
    %p63 = scmp.ne.s32.totalorder %s55, %s57
    %p64 = scmp.eq.s32.totalorder %s26, 1
    %p65 = por %p63, %p64
    %p66 = scmp.ne.s32.totalorder %s57, %s58
    %p67 = scmp.eq.s32.totalorder %s26, 0
    %p68 = por %p66, %p67
    %p69 = scmp.ne.s32.totalorder %s57, %s58
    %p70 = scmp.eq.s32.totalorder %s27, 1
    %p71 = por %p69, %p70
    %p73 = scmp.ne.s32.totalorder %s58, %s72
    %p74 = scmp.eq.s32.totalorder %s27, 0
    %p75 = por %p73, %p74
    %s77 = sadd.s32 %s76, 1
    %p80 = scmp.eq.s32.totalorder %s21, 1
    %p81 = scmp.ne.s32.totalorder %s76, %s78
    %p82 = scmp.eq.s32.totalorder %s21, 0
    %p83 = por %p81, %p82
    %p84 = scmp.ne.s32.totalorder %s76, %s78
    %p85 = scmp.eq.s32.totalorder %s26, 1
    %p86 = por %p84, %p85
    %p87 = scmp.ne.s32.totalorder %s78, %s79
    %p88 = scmp.eq.s32.totalorder %s26, 0
    %p89 = por %p87, %p88
    %p90 = scmp.ne.s32.totalorder %s78, %s79
    %p91 = scmp.eq.s32.totalorder %s27, 1
    %p92 = por %p90, %p91
    %p94 = scmp.ne.s32.totalorder %s79, %s93
    %p95 = scmp.eq.s32.totalorder %s27, 0
    %p96 = por %p94, %p95
    %s98 = sadd.s32 %s97, 1
    %p101 = scmp.eq.s32.totalorder %s21, 1
    %p102 = scmp.ne.s32.totalorder %s97, %s99
    %p103 = scmp.eq.s32.totalorder %s21, 0
    %p104 = por %p102, %p103
    %p105 = scmp.ne.s32.totalorder %s97, %s99
    %p106 = scmp.eq.s32.totalorder %s26, 1
    %p107 = por %p105, %p106
    %p108 = scmp.ne.s32.totalorder %s99, %s100
    %p109 = scmp.eq.s32.totalorder %s26, 0
    %p110 = por %p108, %p109
    %p111 = scmp.ne.s32.totalorder %s99, %s100
    %p112 = scmp.eq.s32.totalorder %s27, 1
    %p113 = por %p111, %p112
    %p115 = scmp.ne.s32.totalorder %s100, %s114
    %p116 = scmp.eq.s32.totalorder %s27, 0
    %p117 = por %p115, %p116
    %s119 = sadd.s32 %s118, 1
    %p122 = scmp.eq.s32.totalorder %s21, 1
    %p123 = scmp.ne.s32.totalorder %s118, %s120
    %p124 = scmp.eq.s32.totalorder %s21, 0
    %p125 = por %p123, %p124
    %p126 = scmp.ne.s32.totalorder %s118, %s120
    %p127 = scmp.eq.s32.totalorder %s26, 1
    %p128 = por %p126, %p127
    %p129 = scmp.ne.s32.totalorder %s120, %s121
    %p130 = scmp.eq.s32.totalorder %s26, 0
    %p131 = por %p129, %p130
    %p132 = scmp.ne.s32.totalorder %s120, %s121
    %p133 = scmp.eq.s32.totalorder %s27, 1
    %p134 = por %p132, %p133
    %p136 = scmp.ne.s32.totalorder %s121, %s135
    %p137 = scmp.eq.s32.totalorder %s27, 0
    %p138 = por %p136, %p137
    %s140 = sadd.s32 %s139, 1
    %p143 = scmp.eq.s32.totalorder %s21, 1
    %p144 = scmp.ne.s32.totalorder %s139, %s141
    %p145 = scmp.eq.s32.totalorder %s21, 0
    %p146 = por %p144, %p145
    %p147 = scmp.ne.s32.totalorder %s139, %s141
    %p148 = scmp.eq.s32.totalorder %s26, 1
    %p149 = por %p147, %p148
    %p150 = scmp.ne.s32.totalorder %s141, %s142
    %p151 = scmp.eq.s32.totalorder %s26, 0
    %p152 = por %p150, %p151
    %p153 = scmp.ne.s32.totalorder %s141, %s142
    %p154 = scmp.eq.s32.totalorder %s27, 1
    %p155 = por %p153, %p154
    %p157 = scmp.ne.s32.totalorder %s142, %s156
    %p158 = scmp.eq.s32.totalorder %s27, 0
    %p159 = por %p157, %p158
    %s161 = sadd.s32 %s160, 1
    %p164 = scmp.eq.s32.totalorder %s21, 1
    %p165 = scmp.ne.s32.totalorder %s160, %s162
    %p166 = scmp.eq.s32.totalorder %s21, 0
    %p167 = por %p165, %p166
    %p168 = scmp.ne.s32.totalorder %s160, %s162
    %p169 = scmp.eq.s32.totalorder %s26, 1
    %p170 = por %p168, %p169
    %p171 = scmp.ne.s32.totalorder %s162, %s163
    %p172 = scmp.eq.s32.totalorder %s26, 0
    %p173 = por %p171, %p172
    %p174 = scmp.ne.s32.totalorder %s162, %s163
    %p175 = scmp.eq.s32.totalorder %s27, 1
    %p176 = por %p174, %p175
    %p178 = scmp.ne.s32.totalorder %s163, %s177
    %p179 = scmp.eq.s32.totalorder %s27, 0
    %p180 = por %p178, %p179
    %s182 = sadd.s32 %s181, 1
    %p185 = scmp.eq.s32.totalorder %s21, 1
    %p186 = scmp.ne.s32.totalorder %s181, %s183
    %p187 = scmp.eq.s32.totalorder %s21, 0
    %p188 = por %p186, %p187
    %p189 = scmp.ne.s32.totalorder %s181, %s183
    %p190 = scmp.eq.s32.totalorder %s26, 1
    %p191 = por %p189, %p190
    %p192 = scmp.ne.s32.totalorder %s183, %s184
    %p193 = scmp.eq.s32.totalorder %s26, 0
    %p194 = por %p192, %p193
    %p195 = scmp.ne.s32.totalorder %s183, %s184
    %p196 = scmp.eq.s32.totalorder %s27, 1
    %p197 = por %p195, %p196
    %p199 = scmp.ne.s32.totalorder %s184, %s198
    %p200 = scmp.eq.s32.totalorder %s27, 0
    %p201 = por %p199, %p200
    %s203 = sadd.s32 %s202, 1
    %p206 = scmp.eq.s32.totalorder %s21, 1
    %p207 = scmp.ne.s32.totalorder %s202, %s204
    %p208 = scmp.eq.s32.totalorder %s21, 0
    %p209 = por %p207, %p208
    %p210 = scmp.ne.s32.totalorder %s202, %s204
    %p211 = scmp.eq.s32.totalorder %s26, 1
    %p212 = por %p210, %p211
    %p213 = scmp.ne.s32.totalorder %s204, %s205
    %p214 = scmp.eq.s32.totalorder %s26, 0
    %p215 = por %p213, %p214
    %p216 = scmp.ne.s32.totalorder %s204, %s205
    %p217 = scmp.eq.s32.totalorder %s27, 1
    %p218 = por %p216, %p217
    %p220 = scmp.ne.s32.totalorder %s205, %s219
    %p221 = scmp.eq.s32.totalorder %s27, 0
    %p222 = por %p220, %p221
    %s223 = ssub.s32 %s21, %s28
    %p224 = scmp.eq.s32.totalorder %s223, 0
    %s226 = sadd.s32 %s225, 1
    %s227 = scalar_select %p224, %s225, %s226
    %p230 = pneg %p224
    %p231 = scmp.eq.s32.totalorder %s21, 1
    %p232 = por %p230, %p231
    %p233 = scmp.ne.s32.totalorder %s225, %s228
    %p234 = scmp.eq.s32.totalorder %s21, 0
    %p235 = por %p233, %p234
    %p236 = scmp.ne.s32.totalorder %s225, %s228
    %p237 = scmp.eq.s32.totalorder %s26, 1
    %p238 = por %p236, %p237
    %p239 = scmp.ne.s32.totalorder %s228, %s229
    %p240 = scmp.eq.s32.totalorder %s26, 0
    %p241 = por %p239, %p240
    %p242 = scmp.ne.s32.totalorder %s228, %s229
    %p243 = scmp.eq.s32.totalorder %s27, 1
    %p244 = por %p242, %p243
    %p246 = scmp.ne.s32.totalorder %s229, %s245
    %p247 = scmp.eq.s32.totalorder %s27, 0
    %p248 = por %p246, %p247
    %p249 = scmp.le.s32.totalorder 1, %s21
    %p250 = scmp.lt.s32.totalorder %s21, 3
    %p251 = pnand %p249, %p250
    %p252 = pneg %p251
    // Predicated region
    $region9: #{_sp_en_model_forward.2} parent=5 // pred_check
      _
    $region10: #{_sp_en_model_forward.2} parent=5 // pred_check_branch
      %254 = sbr.rel (%p251) target = $region12
    $region11: #{_sp_en_model_forward.2} parent=5 // pred_region
      %s255 = ssub.s32 %s21, 1
      // Predicated region
      $region13: #{_sp_en_model_forward.2} parent=11 // pred_check
        %p256 = pneg %p68
      $region14: #{_sp_en_model_forward.2} parent=11 // pred_check_branch
        %258 = sbr.rel (%p256) target = $region16
      $region15: #{_sp_en_model_forward.2} parent=11 // pred_region
        _
      $region16: #{_sp_en_model_forward.2} parent=11 // pred_fallthru
        _
      // Predicated region
      $region17: #{_sp_en_model_forward.2} parent=11 // pred_check
        %p259 = pneg %p89
      $region18: #{_sp_en_model_forward.2} parent=11 // pred_check_branch
        %261 = sbr.rel (%p259) target = $region20
      $region19: #{_sp_en_model_forward.2} parent=11 // pred_region
        _
      $region20: #{_sp_en_model_forward.2} parent=11 // pred_fallthru
        _
      // Predicated region
      $region21: #{_sp_en_model_forward.2} parent=11 // pred_check
        %p262 = pneg %p110
      $region22: #{_sp_en_model_forward.2} parent=11 // pred_check_branch
        %264 = sbr.rel (%p262) target = $region24
      $region23: #{_sp_en_model_forward.2} parent=11 // pred_region
        _
      $region24: #{_sp_en_model_forward.2} parent=11 // pred_fallthru
        _
      // Predicated region
      $region25: #{_sp_en_model_forward.2} parent=11 // pred_check
        %p265 = pneg %p131
      $region26: #{_sp_en_model_forward.2} parent=11 // pred_check_branch
        %267 = sbr.rel (%p265) target = $region28
      $region27: #{_sp_en_model_forward.2} parent=11 // pred_region
        _
      $region28: #{_sp_en_model_forward.2} parent=11 // pred_fallthru
        _
      // Predicated region
      $region29: #{_sp_en_model_forward.2} parent=11 // pred_check
        %p268 = pneg %p152
      $region30: #{_sp_en_model_forward.2} parent=11 // pred_check_branch
        %270 = sbr.rel (%p268) target = $region32
      $region31: #{_sp_en_model_forward.2} parent=11 // pred_region
        _
      $region32: #{_sp_en_model_forward.2} parent=11 // pred_fallthru
        _
      // Predicated region
      $region33: #{_sp_en_model_forward.2} parent=11 // pred_check
        %p271 = pneg %p173
      $region34: #{_sp_en_model_forward.2} parent=11 // pred_check_branch
        %273 = sbr.rel (%p271) target = $region36
      $region35: #{_sp_en_model_forward.2} parent=11 // pred_region
        _
      $region36: #{_sp_en_model_forward.2} parent=11 // pred_fallthru
        _
      // Predicated region
      $region37: #{_sp_en_model_forward.2} parent=11 // pred_check
        %p274 = pneg %p194
      $region38: #{_sp_en_model_forward.2} parent=11 // pred_check_branch
        %276 = sbr.rel (%p274) target = $region40
      $region39: #{_sp_en_model_forward.2} parent=11 // pred_region
        _
      $region40: #{_sp_en_model_forward.2} parent=11 // pred_fallthru
        _
      // Predicated region
      $region41: #{_sp_en_model_forward.2} parent=11 // pred_check
        %p277 = pneg %p215
      $region42: #{_sp_en_model_forward.2} parent=11 // pred_check_branch
        %279 = sbr.rel (%p277) target = $region44
      $region43: #{_sp_en_model_forward.2} parent=11 // pred_region
        _
      $region44: #{_sp_en_model_forward.2} parent=11 // pred_fallthru
        _
    $region12: #{_sp_en_model_forward.2} parent=5 // pred_fallthru
      _
    %p280 = scmp.lt.s32.totalorder %s21, 2
    // Predicated region
    $region45: #{_sp_en_model_forward.2} parent=5 // pred_check
      %p281 = pneg %p280
    $region46: #{_sp_en_model_forward.2} parent=5 // pred_check_branch
      %283 = sbr.rel (%p281) target = $region48
    $region47: #{_sp_en_model_forward.2} parent=5 // pred_region
      // Predicated region
      $region49: #{_sp_en_model_forward.2} parent=47 // pred_check
        %p284 = pneg %p41
      $region50: #{_sp_en_model_forward.2} parent=47 // pred_check_branch
        %286 = sbr.rel (%p284) target = $region52
      $region51: #{_sp_en_model_forward.2} parent=47 // pred_region
        %s287 = smul.u32 2, %s21
        %p288 = scmp.lt.s32.totalorder %s287, 3
        %s289 = scalar_select %p288, %s287, 3
        %s290 = smul.addr %s289, 4
        %s291 = scalar_lea.vmem %s8, %s290
        %s292 = smul.u32 2, %s21
      $region52: #{_sp_en_model_forward.2} parent=47 // pred_fallthru
        _
    $region48: #{_sp_en_model_forward.2} parent=5 // pred_fallthru
      _
    %p293 = scmp.le.s32.totalorder 1, %s21
    %p294 = scmp.lt.s32.totalorder %s21, 3
    %p295 = pnand %p293, %p294
    %p296 = pneg %p295
    // Predicated region
    $region53: #{_sp_en_model_forward.2} parent=5 // pred_check
      _
    $region54: #{_sp_en_model_forward.2} parent=5 // pred_check_branch
      %298 = sbr.rel (%p295) target = $region56
    $region55: #{_sp_en_model_forward.2} parent=5 // pred_region
      #allocation7 [shape = 'u8[4096]{0}', space=vmem, size = 0x1000, dematerialized = true, scoped, tag = 'FusionAdapter Buffer %fusion.1 = bf16[32,128]{1,0:T(8,128)(2,1)} fusion(%param_8.1, %param_9), kind=kLoop, calls=%fused_computation.2.clone, metadata={op_name="jit(_sp_en_model_forward)/jit(_pad)/pad" stack_frame_id=1}']
      %s299 = ssub.s32 %s21, 1
      %s300 = smul.u32 2, %s26
      %p301 = scmp.lt.s32.totalorder %s300, 3
      %s302 = scalar_select %p301, %s300, 3
      %s303 = smul.addr %s302, 4
      %s304 = scalar_lea.vmem %s8, %s303
      %p305 = pneg %p47
      %p306 = pneg %p44
      %p307 = pneg %p68
      %p308 = pneg %p65
      %p309 = pneg %p89
      %p310 = pneg %p86
      %p311 = pneg %p110
      %p312 = pneg %p107
      %p313 = pneg %p131
      %p314 = pneg %p128
      %p315 = pneg %p152
      %p316 = pneg %p149
      %p317 = pneg %p173
      %p318 = pneg %p170
      %p319 = pneg %p194
      %p320 = pneg %p191
      %p321 = pneg %p215
      %p322 = pneg %p212
      %p323 = pneg %p241
      %p324 = pneg %p238
      %s325 = smul.u32 2, %s26
      %p326 = scmp.lt.s32.totalorder %s325, 3
      %s327 = scalar_select %p326, %s325, 3
      %s328 = smul.addr %s327, 4
      %s329 = scalar_lea.vmem %s10, %s328
      %s330 = smul.u32 2, %s26
      %p331 = scmp.lt.s32.totalorder %s330, 3
      %s332 = scalar_select %p331, %s330, 3
      %s333 = smul.addr %s332, 4
      %s334 = scalar_lea.vmem %s8, %s333
      %s335 = smul.u32 2, %s26
      %s336 = smul.u32 2, %s26
      %p337 = scmp.lt.s32.totalorder %s336, 3
      %s338 = scalar_select %p337, %s336, 3
      %s339 = smul.addr %s338, 4
      %s340 = scalar_lea.vmem %s10, %s339
      %s341 = smul.u32 2, %s26
      %s343 = sor.u32 255, 127
      %s344 = sand.u32 %s343, 85
      %s345 = sshrl.u32 %s344, 1
      %s346 = sor.u32 %s344, %s345
      %s347 = sand.u32 51, %s346
      %s348 = sshrl.u32 %s347, 2
      %s349 = sor.u32 %s347, %s348
      %s350 = sand.u32 15, %s349
      %v351 = vld [vmem:[%s334] sm:%s350]
      %v352 = vunpack.c.l.bf16 %v351
      %v353 = vunpack.c.h.bf16 %v351
      %v354 = vlaneseq
      %v355 = vand.u32 %v354, 127
      %vm357 = vcmp.lt.s32.totalorder %v355, 32
      %v358 = vsel %vm357, %v352, %v16
      %v359 = vpack.c.bf16 0.0, %v358
      %361 = vst [vmem:[#allocation7] sm:$0xf] %v359
      %s362 = scalar_lea.vmem %s334, 4
      %s364 = sor.u32 255, 127
      %s365 = sand.u32 %s364, 85
      %s366 = sshrl.u32 %s365, 1
      %s367 = sor.u32 %s365, %s366
      %s368 = sand.u32 51, %s367
      %s369 = sshrl.u32 %s368, 2
      %s370 = sor.u32 %s368, %s369
      %s371 = sand.u32 15, %s370
      %v372 = vld [vmem:[%s362] sm:%s371]
      %v373 = vunpack.c.l.bf16 %v372
      %v374 = vunpack.c.h.bf16 %v372
      %v375 = vlaneseq
      %v376 = vand.u32 %v375, 127
      %vm378 = vcmp.lt.s32.totalorder %v376, 32
      %v379 = vsel %vm378, %v373, %v16
      %s380 = scalar_lea.vmem [#allocation7], 4
      %v381 = vpack.c.bf16 0.0, %v379
      %383 = vst [vmem:[%s380] sm:$0xf] %v381
      %v386 = vld [vmem:[#allocation7] sm:$0xf]
      %v387 = vld [vmem:[#allocation7 + $0x4] sm:$0xf]
      %v388 = vld [vmem:[%s0] sm:$0xf]
      %v389 = vld [vmem:[%s0 + $0x4] sm:$0xf]
      %v390 = vld [vmem:[%s0 + $0x8] sm:$0xf]
      %v391 = vld [vmem:[%s0 + $0xc] sm:$0xf]
      %v392 = vld [vmem:[%s0 + $0x10] sm:$0xf]
      %v393 = vld [vmem:[%s0 + $0x14] sm:$0xf]
      %v394 = vld [vmem:[%s0 + $0x18] sm:$0xf]
      %v395 = vld [vmem:[%s0 + $0x1c] sm:$0xf]
      %v396 = vld [vmem:[%s0 + $0x20] sm:$0xf]
      %v397 = vld [vmem:[%s0 + $0x24] sm:$0xf]
      %v398 = vld [vmem:[%s0 + $0x28] sm:$0xf]
      %v399 = vld [vmem:[%s0 + $0x2c] sm:$0xf]
      %v400 = vld [vmem:[%s0 + $0x30] sm:$0xf]
      %v401 = vld [vmem:[%s0 + $0x34] sm:$0xf]
      %v402 = vld [vmem:[%s0 + $0x38] sm:$0xf]
      %v403 = vld [vmem:[%s0 + $0x3c] sm:$0xf]
      %v404 = vld [vmem:[%s1] sm:$0x1]
      %v406 = vlaneseq
      %v407 = vshrl.u32 %v406, 7
      %v408 = vsub.s32 0, %v407
      %v409 = vrot.slane %v404, %v408
      %v413 = vunpack.c.l.b16 %v386
      %v414 = vunpack.c.l.b16 %v387
      %v415 = vpack.c.b16 %v414, %v413
      %v433 = vunpack.c.l.b16 %v388
      %v434 = vunpack.c.l.b16 %v389
      %v435 = vunpack.c.l.b16 %v390
      %v436 = vunpack.c.l.b16 %v391
      %v437 = vunpack.c.l.b16 %v392
      %v438 = vunpack.c.l.b16 %v393
      %v439 = vunpack.c.l.b16 %v394
      %v440 = vunpack.c.l.b16 %v395
      %v441 = vunpack.c.l.b16 %v396
      %v442 = vunpack.c.l.b16 %v397
      %v443 = vunpack.c.l.b16 %v398
      %v444 = vunpack.c.l.b16 %v399
      %v445 = vunpack.c.l.b16 %v400
      %v446 = vunpack.c.l.b16 %v401
      %v447 = vunpack.c.l.b16 %v402
      %v448 = vunpack.c.l.b16 %v403
      %v449 = vpack.c.b16 %v434, %v433
      %v450 = vpack.c.b16 %v436, %v435
      %v451 = vpack.c.b16 %v438, %v437
      %v452 = vpack.c.b16 %v440, %v439
      %v453 = vpack.c.b16 %v442, %v441
      %v454 = vpack.c.b16 %v444, %v443
      %v455 = vpack.c.b16 %v446, %v445
      %v456 = vpack.c.b16 %v448, %v447
      %465 = vmatprep.subr.bf16.mxu0 0
      %466 = vmatpush1.bf16.msra.mxu0 %v449
      %467 = vmatprep.subr.bf16.mxu0 0
      %468 = vmatpush1.bf16.msra.mxu0 %v450
      %469 = vmatprep.subr.bf16.mxu0 0
      %470 = vmatpush1.bf16.msra.mxu0 %v451
      %471 = vmatprep.subr.bf16.mxu0 0
      %472 = vmatpush1.bf16.msra.mxu0 %v452
      %473 = vmatprep.subr.bf16.mxu0 0
      %474 = vmatpush1.bf16.msra.mxu0 %v453
      %475 = vmatprep.subr.bf16.mxu0 0
      %476 = vmatpush1.bf16.msra.mxu0 %v454
      %477 = vmatprep.subr.bf16.mxu0 0
      %478 = vmatpush1.bf16.msra.mxu0 %v455
      %479 = vmatprep.subr.bf16.mxu0 0
      %480 = vmatpush1.bf16.msra.mxu0 %v456
      %481 = vmatprep.subr.bf16.mxu0 0
      %482 = vmatpush1.bf16.msra.mxu0 0
      %483 = vmatprep.subr.bf16.mxu0 0
      %484 = vmatpush1.bf16.msra.mxu0 0
      %485 = vmatprep.subr.bf16.mxu0 0
      %486 = vmatpush1.bf16.msra.mxu0 0
      %487 = vmatprep.subr.bf16.mxu0 0
      %488 = vmatpush1.bf16.msra.mxu0 0
      %489 = vmatprep.subr.bf16.mxu0 0
      %490 = vmatpush1.bf16.msra.mxu0 0
      %491 = vmatprep.subr.bf16.mxu0 0
      %492 = vmatpush1.bf16.msra.mxu0 0
      %493 = vmatprep.subr.bf16.mxu0 0
      %494 = vmatpush1.bf16.msra.mxu0 0
      %495 = vmatprep.subr.bf16.mxu0 0
      %496 = vmatpush1.bf16.msra.mxu0 0
      %497 = vmatprep.mubr.bf16.mxu0 0
      %498 = vmatmul.mubr.bf16.gmra.mrb[0].mxu0 %v415
      %v499 = vpop.f32.mrb[0].mxu0
      %v500 = vadd.f32 %v409, %v499
      %v501 = vpop.f32.mrb[0].mxu0
      %v502 = vpop.f32.mrb[0].mxu0
      %v503 = vadd.f32 %v409, %v502
      %v504 = vpop.f32.mrb[0].mxu0
      %505 = vdwg.mxu0
      %v506 = vmul.f32 %v500, 0.5
      %v507 = vmul.f32 %v503, 0.5
      %v508 = vpack.c.bf16 %v507, %v506
      %v509 = vtanh.bf16.pop %v508
      %v510 = vmul.bf16 %v509, 1056980736
      %v511 = vadd.bf16 %v510, 1056980736
      %v512 = vld [vmem:[%s2] sm:$0xf]
      %v513 = vld [vmem:[%s2 + $0x4] sm:$0xf]
      %v514 = vld [vmem:[%s2 + $0x8] sm:$0xf]
      %v515 = vld [vmem:[%s2 + $0xc] sm:$0xf]
      %v516 = vld [vmem:[%s2 + $0x10] sm:$0xf]
      %v517 = vld [vmem:[%s2 + $0x14] sm:$0xf]
      %v518 = vld [vmem:[%s2 + $0x18] sm:$0xf]
      %v519 = vld [vmem:[%s2 + $0x1c] sm:$0xf]
      %v520 = vld [vmem:[%s2 + $0x20] sm:$0xf]
      %v521 = vld [vmem:[%s2 + $0x24] sm:$0xf]
      %v522 = vld [vmem:[%s2 + $0x28] sm:$0xf]
      %v523 = vld [vmem:[%s2 + $0x2c] sm:$0xf]
      %v524 = vld [vmem:[%s2 + $0x30] sm:$0xf]
      %v525 = vld [vmem:[%s2 + $0x34] sm:$0xf]
      %v526 = vld [vmem:[%s2 + $0x38] sm:$0xf]
      %v527 = vld [vmem:[%s2 + $0x3c] sm:$0xf]
      %v528 = vld [vmem:[%s3] sm:$0x1]
      %v530 = vlaneseq
      %v531 = vshrl.u32 %v530, 7
      %v532 = vsub.s32 0, %v531
      %v533 = vrot.slane %v528, %v532
      %v551 = vunpack.c.l.b16 %v512
      %v552 = vunpack.c.l.b16 %v513
      %v553 = vunpack.c.l.b16 %v514
      %v554 = vunpack.c.l.b16 %v515
      %v555 = vunpack.c.l.b16 %v516
      %v556 = vunpack.c.l.b16 %v517
      %v557 = vunpack.c.l.b16 %v518
      %v558 = vunpack.c.l.b16 %v519
      %v559 = vunpack.c.l.b16 %v520
      %v560 = vunpack.c.l.b16 %v521
      %v561 = vunpack.c.l.b16 %v522
      %v562 = vunpack.c.l.b16 %v523
      %v563 = vunpack.c.l.b16 %v524
      %v564 = vunpack.c.l.b16 %v525
      %v565 = vunpack.c.l.b16 %v526
      %v566 = vunpack.c.l.b16 %v527
      %v567 = vpack.c.b16 %v552, %v551
      %v568 = vpack.c.b16 %v554, %v553
      %v569 = vpack.c.b16 %v556, %v555
      %v570 = vpack.c.b16 %v558, %v557
      %v571 = vpack.c.b16 %v560, %v559
      %v572 = vpack.c.b16 %v562, %v561
      %v573 = vpack.c.b16 %v564, %v563
      %v574 = vpack.c.b16 %v566, %v565
      %583 = vmatprep.subr.bf16.mxu0 0
      %584 = vmatpush1.bf16.msra.mxu0 %v567
      %585 = vmatprep.subr.bf16.mxu0 0
      %586 = vmatpush1.bf16.msra.mxu0 %v568
      %587 = vmatprep.subr.bf16.mxu0 0
      %588 = vmatpush1.bf16.msra.mxu0 %v569
      %589 = vmatprep.subr.bf16.mxu0 0
      %590 = vmatpush1.bf16.msra.mxu0 %v570
      %591 = vmatprep.subr.bf16.mxu0 0
      %592 = vmatpush1.bf16.msra.mxu0 %v571
      %593 = vmatprep.subr.bf16.mxu0 0
      %594 = vmatpush1.bf16.msra.mxu0 %v572
      %595 = vmatprep.subr.bf16.mxu0 0
      %596 = vmatpush1.bf16.msra.mxu0 %v573
      %597 = vmatprep.subr.bf16.mxu0 0
      %598 = vmatpush1.bf16.msra.mxu0 %v574
      %599 = vmatprep.subr.bf16.mxu0 0
      %600 = vmatpush1.bf16.msra.mxu0 0
      %601 = vmatprep.subr.bf16.mxu0 0
      %602 = vmatpush1.bf16.msra.mxu0 0
      %603 = vmatprep.subr.bf16.mxu0 0
      %604 = vmatpush1.bf16.msra.mxu0 0
      %605 = vmatprep.subr.bf16.mxu0 0
      %606 = vmatpush1.bf16.msra.mxu0 0
      %607 = vmatprep.subr.bf16.mxu0 0
      %608 = vmatpush1.bf16.msra.mxu0 0
      %609 = vmatprep.subr.bf16.mxu0 0
      %610 = vmatpush1.bf16.msra.mxu0 0
      %611 = vmatprep.subr.bf16.mxu0 0
      %612 = vmatpush1.bf16.msra.mxu0 0
      %613 = vmatprep.subr.bf16.mxu0 0
      %614 = vmatpush1.bf16.msra.mxu0 0
      %615 = vmatprep.mubr.bf16.mxu0 0
      %616 = vmatmul.mubr.bf16.gmra.mrb[0].mxu0 %v511
      %v617 = vpop.f32.mrb[0].mxu0
      %v618 = vadd.f32 %v533, %v617
      %v619 = vpop.f32.mrb[0].mxu0
      %v620 = vpop.f32.mrb[0].mxu0
      %v621 = vadd.f32 %v533, %v620
      %v622 = vpop.f32.mrb[0].mxu0
      %623 = vdwg.mxu0
      %v624 = vmul.f32 %v618, 0.5
      %v625 = vmul.f32 %v621, 0.5
      %v626 = vpack.c.bf16 %v625, %v624
      %v627 = vtanh.bf16.pop %v626
      %v628 = vmul.bf16 %v627, 1056980736
      %v629 = vadd.bf16 %v628, 1056980736
      %v630 = vld [vmem:[%s4] sm:$0xf]
      %v631 = vld [vmem:[%s4 + $0x4] sm:$0xf]
      %v632 = vld [vmem:[%s4 + $0x8] sm:$0xf]
      %v633 = vld [vmem:[%s4 + $0xc] sm:$0xf]
      %v634 = vld [vmem:[%s4 + $0x10] sm:$0xf]
      %v635 = vld [vmem:[%s4 + $0x14] sm:$0xf]
      %v636 = vld [vmem:[%s4 + $0x18] sm:$0xf]
      %v637 = vld [vmem:[%s4 + $0x1c] sm:$0xf]
      %v638 = vld [vmem:[%s4 + $0x20] sm:$0xf]
      %v639 = vld [vmem:[%s4 + $0x24] sm:$0xf]
      %v640 = vld [vmem:[%s4 + $0x28] sm:$0xf]
      %v641 = vld [vmem:[%s4 + $0x2c] sm:$0xf]
      %v642 = vld [vmem:[%s4 + $0x30] sm:$0xf]
      %v643 = vld [vmem:[%s4 + $0x34] sm:$0xf]
      %v644 = vld [vmem:[%s4 + $0x38] sm:$0xf]
      %v645 = vld [vmem:[%s4 + $0x3c] sm:$0xf]
      %v646 = vld [vmem:[%s5] sm:$0x1]
      %v648 = vlaneseq
      %v649 = vshrl.u32 %v648, 7
      %v650 = vsub.s32 0, %v649
      %v651 = vrot.slane %v646, %v650
      %v669 = vunpack.c.l.b16 %v630
      %v670 = vunpack.c.l.b16 %v631
      %v671 = vunpack.c.l.b16 %v632
      %v672 = vunpack.c.l.b16 %v633
      %v673 = vunpack.c.l.b16 %v634
      %v674 = vunpack.c.l.b16 %v635
      %v675 = vunpack.c.l.b16 %v636
      %v676 = vunpack.c.l.b16 %v637
      %v677 = vunpack.c.l.b16 %v638
      %v678 = vunpack.c.l.b16 %v639
      %v679 = vunpack.c.l.b16 %v640
      %v680 = vunpack.c.l.b16 %v641
      %v681 = vunpack.c.l.b16 %v642
      %v682 = vunpack.c.l.b16 %v643
      %v683 = vunpack.c.l.b16 %v644
      %v684 = vunpack.c.l.b16 %v645
      %v685 = vpack.c.b16 %v670, %v669
      %v686 = vpack.c.b16 %v672, %v671
      %v687 = vpack.c.b16 %v674, %v673
      %v688 = vpack.c.b16 %v676, %v675
      %v689 = vpack.c.b16 %v678, %v677
      %v690 = vpack.c.b16 %v680, %v679
      %v691 = vpack.c.b16 %v682, %v681
      %v692 = vpack.c.b16 %v684, %v683
      %701 = vmatprep.subr.bf16.mxu0 0
      %702 = vmatpush1.bf16.msra.mxu0 %v685
      %703 = vmatprep.subr.bf16.mxu0 0
      %704 = vmatpush1.bf16.msra.mxu0 %v686
      %705 = vmatprep.subr.bf16.mxu0 0
      %706 = vmatpush1.bf16.msra.mxu0 %v687
      %707 = vmatprep.subr.bf16.mxu0 0
      %708 = vmatpush1.bf16.msra.mxu0 %v688
      %709 = vmatprep.subr.bf16.mxu0 0
      %710 = vmatpush1.bf16.msra.mxu0 %v689
      %711 = vmatprep.subr.bf16.mxu0 0
      %712 = vmatpush1.bf16.msra.mxu0 %v690
      %713 = vmatprep.subr.bf16.mxu0 0
      %714 = vmatpush1.bf16.msra.mxu0 %v691
      %715 = vmatprep.subr.bf16.mxu0 0
      %716 = vmatpush1.bf16.msra.mxu0 %v692
      %717 = vmatprep.subr.bf16.mxu0 0
      %718 = vmatpush1.bf16.msra.mxu0 0
      %719 = vmatprep.subr.bf16.mxu0 0
      %720 = vmatpush1.bf16.msra.mxu0 0
      %721 = vmatprep.subr.bf16.mxu0 0
      %722 = vmatpush1.bf16.msra.mxu0 0
      %723 = vmatprep.subr.bf16.mxu0 0
      %724 = vmatpush1.bf16.msra.mxu0 0
      %725 = vmatprep.subr.bf16.mxu0 0
      %726 = vmatpush1.bf16.msra.mxu0 0
      %727 = vmatprep.subr.bf16.mxu0 0
      %728 = vmatpush1.bf16.msra.mxu0 0
      %729 = vmatprep.subr.bf16.mxu0 0
      %730 = vmatpush1.bf16.msra.mxu0 0
      %731 = vmatprep.subr.bf16.mxu0 0
      %732 = vmatpush1.bf16.msra.mxu0 0
      %733 = vmatprep.mubr.bf16.mxu0 0
      %734 = vmatmul.mubr.bf16.gmra.mrb[0].mxu0 %v629
      %v735 = vpop.f32.mrb[0].mxu0
      %v736 = vadd.f32 %v651, %v735
      %v737 = vpop.f32.mrb[0].mxu0
      %v738 = vpop.f32.mrb[0].mxu0
      %v739 = vadd.f32 %v651, %v738
      %v740 = vpop.f32.mrb[0].mxu0
      %741 = vdwg.mxu0
      %v742 = vmul.f32 %v736, 0.5
      %v743 = vmul.f32 %v739, 0.5
      %v744 = vpack.c.bf16 %v743, %v742
      %v745 = vtanh.bf16.pop %v744
      %v746 = vmul.bf16 %v745, 1056980736
      %v747 = vadd.bf16 %v746, 1056980736
      %v748 = vld [vmem:[%s6] sm:$0xf]
      %v749 = vld [vmem:[%s6 + $0x4] sm:$0xf]
      %v750 = vld [vmem:[%s6 + $0x8] sm:$0xf]
      %v751 = vld [vmem:[%s6 + $0xc] sm:$0xf]
      %v752 = vld [vmem:[%s6 + $0x10] sm:$0xf]
      %v753 = vld [vmem:[%s6 + $0x14] sm:$0xf]
      %v754 = vld [vmem:[%s6 + $0x18] sm:$0xf]
      %v755 = vld [vmem:[%s6 + $0x1c] sm:$0xf]
      %v756 = vld [vmem:[%s6 + $0x20] sm:$0xf]
      %v757 = vld [vmem:[%s6 + $0x24] sm:$0xf]
      %v758 = vld [vmem:[%s6 + $0x28] sm:$0xf]
      %v759 = vld [vmem:[%s6 + $0x2c] sm:$0xf]
      %v760 = vld [vmem:[%s6 + $0x30] sm:$0xf]
      %v761 = vld [vmem:[%s6 + $0x34] sm:$0xf]
      %v762 = vld [vmem:[%s6 + $0x38] sm:$0xf]
      %v763 = vld [vmem:[%s6 + $0x3c] sm:$0xf]
      %v764 = vld [vmem:[%s7] sm:$0x1]
      %v766 = vlaneseq
      %v767 = vshrl.u32 %v766, 7
      %v768 = vsub.s32 0, %v767
      %v769 = vrot.slane %v764, %v768
      %v787 = vunpack.c.l.b16 %v748
      %v788 = vunpack.c.l.b16 %v749
      %v789 = vunpack.c.l.b16 %v750
      %v790 = vunpack.c.l.b16 %v751
      %v791 = vunpack.c.l.b16 %v752
      %v792 = vunpack.c.l.b16 %v753
      %v793 = vunpack.c.l.b16 %v754
      %v794 = vunpack.c.l.b16 %v755
      %v795 = vunpack.c.l.b16 %v756
      %v796 = vunpack.c.l.b16 %v757
      %v797 = vunpack.c.l.b16 %v758
      %v798 = vunpack.c.l.b16 %v759
      %v799 = vunpack.c.l.b16 %v760
      %v800 = vunpack.c.l.b16 %v761
      %v801 = vunpack.c.l.b16 %v762
      %v802 = vunpack.c.l.b16 %v763
      %v803 = vpack.c.b16 %v788, %v787
      %v804 = vpack.c.b16 %v790, %v789
      %v805 = vpack.c.b16 %v792, %v791
      %v806 = vpack.c.b16 %v794, %v793
      %v807 = vpack.c.b16 %v796, %v795
      %v808 = vpack.c.b16 %v798, %v797
      %v809 = vpack.c.b16 %v800, %v799
      %v810 = vpack.c.b16 %v802, %v801
      %819 = vmatprep.subr.bf16.mxu0 0
      %820 = vmatpush1.bf16.msra.mxu0 %v803
      %821 = vmatprep.subr.bf16.mxu0 0
      %822 = vmatpush1.bf16.msra.mxu0 %v804
      %823 = vmatprep.subr.bf16.mxu0 0
      %824 = vmatpush1.bf16.msra.mxu0 %v805
      %825 = vmatprep.subr.bf16.mxu0 0
      %826 = vmatpush1.bf16.msra.mxu0 %v806
      %827 = vmatprep.subr.bf16.mxu0 0
      %828 = vmatpush1.bf16.msra.mxu0 %v807
      %829 = vmatprep.subr.bf16.mxu0 0
      %830 = vmatpush1.bf16.msra.mxu0 %v808
      %831 = vmatprep.subr.bf16.mxu0 0
      %832 = vmatpush1.bf16.msra.mxu0 %v809
      %833 = vmatprep.subr.bf16.mxu0 0
      %834 = vmatpush1.bf16.msra.mxu0 %v810
      %835 = vmatprep.subr.bf16.mxu0 0
      %836 = vmatpush1.bf16.msra.mxu0 0
      %837 = vmatprep.subr.bf16.mxu0 0
      %838 = vmatpush1.bf16.msra.mxu0 0
      %839 = vmatprep.subr.bf16.mxu0 0
      %840 = vmatpush1.bf16.msra.mxu0 0
      %841 = vmatprep.subr.bf16.mxu0 0
      %842 = vmatpush1.bf16.msra.mxu0 0
      %843 = vmatprep.subr.bf16.mxu0 0
      %844 = vmatpush1.bf16.msra.mxu0 0
      %845 = vmatprep.subr.bf16.mxu0 0
      %846 = vmatpush1.bf16.msra.mxu0 0
      %847 = vmatprep.subr.bf16.mxu0 0
      %848 = vmatpush1.bf16.msra.mxu0 0
      %849 = vmatprep.subr.bf16.mxu0 0
      %850 = vmatpush1.bf16.msra.mxu0 0
      %851 = vmatprep.mubr.bf16.mxu0 0
      %852 = vmatmul.mubr.bf16.gmra.mrb[0].mxu0 %v747
      %v853 = vpop.f32.mrb[0].mxu0
      %v854 = vadd.f32 %v769, %v853
      %v855 = vpop.f32.mrb[0].mxu0
      %v856 = vpop.f32.mrb[0].mxu0
      %v857 = vadd.f32 %v769, %v856
      %v858 = vpop.f32.mrb[0].mxu0
      %859 = vdwg.mxu0
      %v860 = vmul.f32 %v854, 0.5
      %v861 = vmul.f32 %v857, 0.5
      %v862 = vpack.c.bf16 %v861, %v860
      %v863 = vtanh.bf16.pop %v862
      %v864 = vmul.bf16 %v863, 1056980736
      %v865 = vadd.bf16 %v864, 1056980736
      %v867 = vunpack.c.l.b16 %v865
      %v868 = vunpack.c.h.b16 %v865
      %v869 = vpack.c.b16 %v867, %v867
      %v870 = vpack.c.b16 %v868, %v868
      %873 = vst [vmem:[%s340] sm:$0xf] %v869
      %874 = vst [vmem:[%s340 + $0x4] sm:$0xf] %v870
      %s875 = smul.u32 2, %s26
      %p876 = scmp.lt.s32.totalorder %s875, 3
      %s877 = scalar_select %p876, %s875, 3
      %s878 = smul.addr %s877, 4
      %s879 = scalar_lea.vmem %s10, %s878
      // Predicated region
      $region57: #{_sp_en_model_forward.2} parent=55 // pred_check
        %p880 = pneg %p238
      $region58: #{_sp_en_model_forward.2} parent=55 // pred_check_branch
        %882 = sbr.rel (%p880) target = $region60
      $region59: #{_sp_en_model_forward.2} parent=55 // pred_region
        %s883 = smul.u32 2, %s26
      $region60: #{_sp_en_model_forward.2} parent=55 // pred_fallthru
        _
    $region56: #{_sp_en_model_forward.2} parent=5 // pred_fallthru
      _
    %p884 = scmp.le.s32.totalorder 2, %s21
    // Predicated region
    $region61: #{_sp_en_model_forward.2} parent=5 // pred_check
      %p885 = pneg %p884
    $region62: #{_sp_en_model_forward.2} parent=5 // pred_check_branch
      %887 = sbr.rel (%p885) target = $region64
    $region63: #{_sp_en_model_forward.2} parent=5 // pred_region
      %s888 = ssub.s32 %s21, 2
      // Predicated region
      $region65: #{_sp_en_model_forward.2} parent=63 // pred_check
        %p889 = pneg %p244
      $region66: #{_sp_en_model_forward.2} parent=63 // pred_check_branch
        %891 = sbr.rel (%p889) target = $region68
      $region67: #{_sp_en_model_forward.2} parent=63 // pred_region
        %s892 = smul.u32 2, %s27
        %p893 = scmp.lt.s32.totalorder %s892, 3
        %s894 = scalar_select %p893, %s892, 3
        %s895 = smul.addr %s894, 4
        %s896 = scalar_lea.vmem %s10, %s895
      $region68: #{_sp_en_model_forward.2} parent=63 // pred_fallthru
        _
    $region64: #{_sp_en_model_forward.2} parent=5 // pred_fallthru
      _
  $region6: #{_sp_en_model_forward.2} parent=0 // loop_footer
    %s25 = sadd.s32 1, %s21
  $region7: #{_sp_en_model_forward.2} parent=0 // loop_footer_branch
    %20 = sbr.rel target = $region3
  $region8: #{_sp_en_model_forward.2} parent=0 // loop_exit
    _

</llo_original>
